<compile_context>
chip_gen: v7x
topology: tpu7x:2x2x1
jax: 0.10.0
libtpu: 0.0.40
codegen_flags: <defaults>
</compile_context>

<pallas_src>
import math
import jax
import jax.numpy as jnp
from jax.experimental import pallas as pl
from jax.experimental.pallas import tpu as pltpu


def _round_up(x, m):
    return ((x + m - 1) // m) * m


def _sigmoid(z):
    # exact sigmoid (EUP exp + VPU); matches torch.sigmoid within f32 tolerance
    return 1.0 / (1.0 + jnp.exp(-z))


def _exrnn_step_kernel(x_ref, h_ref, w1x_ref, w1h_ref, b1_ref,
                       w2_ref, b2_ref, out_ref, newh_ref):
    # hidden pre-activation: concat([x, h]) @ W1 == x @ W1x + h @ W1h
    z = jnp.dot(x_ref[...], w1x_ref[...], preferred_element_type=jnp.float32)
    z = z + jnp.dot(h_ref[...], w1h_ref[...], preferred_element_type=jnp.float32)
    z = z + b1_ref[...]                      # (1, Hp) broadcasts over rows
    nh = _sigmoid(z)                         # f32 epilogue, single VPU/EUP pass
    newh_ref[...] = nh.astype(newh_ref.dtype)

    y = jnp.dot(nh.astype(w2_ref.dtype), w2_ref[...],
                preferred_element_type=jnp.float32)
    y = y + b2_ref[...]
    out_ref[...] = _sigmoid(y).astype(out_ref.dtype)


def exrnn_forward(params, x, hidden_state, *, tm_cap=512,
                  vmem_budget_bytes=24 * 1024 * 1024):
    """Pallas equivalent of ExRNN.forward(x, hidden_state) -> (output, new_hidden)."""
    w1, b1, w2, b2 = params["w1"], params["b1"], params["w2"], params["b2"]
    batch, in_size = x.shape
    hidden = hidden_state.shape[-1]
    out_size = w2.shape[-1]

    # Split the concat-matmul weights.
    w1x = w1[:in_size]
    w1h = w1[in_size:]

    # Pad to TPU-friendly (8, 128)-aligned tiles (lane-dense stores, full MXU tiles).
    kx_p = _round_up(in_size, 128)
    h_p = _round_up(hidden, 128)
    o_p = _round_up(out_size, 128)

    # Pick an M tile: big enough to pipeline, small enough for VMEM (v7x: 64 MiB
    # physical / 32 MiB scoped).  Weights are resident; activations double-buffered.
    w_bytes = 4 * (kx_p * h_p + h_p * h_p + h_p + h_p * o_p + o_p)
    tm = min(tm_cap, _round_up(batch, 8))
    while tm > 8 and 2 * tm * (kx_p + 2 * h_p + o_p) * 4 + w_bytes > vmem_budget_bytes:
        tm //= 2
    tm = max(_round_up(tm, 8), 8)
    m_p = _round_up(batch, tm)

    f32 = jnp.float32
    x_p = jnp.zeros((m_p, kx_p), f32).at[:batch, :in_size].set(x.astype(f32))
    hs_p = jnp.zeros((m_p, h_p), f32).at[:batch, :hidden].set(hidden_state.astype(f32))
    w1x_p = jnp.zeros((kx_p, h_p), f32).at[:in_size, :hidden].set(w1x.astype(f32))
    w1h_p = jnp.zeros((h_p, h_p), f32).at[:hidden, :hidden].set(w1h.astype(f32))
    b1_p = jnp.zeros((1, h_p), f32).at[:, :hidden].set(b1.reshape(1, -1).astype(f32))
    w2_p = jnp.zeros((h_p, o_p), f32).at[:hidden, :out_size].set(w2.astype(f32))
    b2_p = jnp.zeros((1, o_p), f32).at[:, :out_size].set(b2.reshape(1, -1).astype(f32))

    grid = (m_p // tm,)

    flops = 2 * m_p * (kx_p * h_p + h_p * h_p + h_p * o_p)
    transcendentals = m_p * (h_p + o_p)
    bytes_accessed = 4 * (m_p * (kx_p + 2 * h_p + o_p)
                          + kx_p * h_p + h_p * h_p + h_p + h_p * o_p + o_p)

    out_p, newh_p = pl.pallas_call(
        _exrnn_step_kernel,
        out_shape=(
            jax.ShapeDtypeStruct((m_p, o_p), f32),
            jax.ShapeDtypeStruct((m_p, h_p), f32),
        ),
        grid_spec=pltpu.PrefetchScalarGridSpec(
            num_scalar_prefetch=0,
            grid=grid,
            in_specs=[
                pl.BlockSpec((tm, kx_p), lambda i: (i, 0)),     # x tile
                pl.BlockSpec((tm, h_p), lambda i: (i, 0)),      # hidden tile
                pl.BlockSpec((kx_p, h_p), lambda i: (0, 0)),    # W1x (resident)
                pl.BlockSpec((h_p, h_p), lambda i: (0, 0)),     # W1h (resident)
                pl.BlockSpec((1, h_p), lambda i: (0, 0)),       # b1  (resident)
                pl.BlockSpec((h_p, o_p), lambda i: (0, 0)),     # W2  (resident)
                pl.BlockSpec((1, o_p), lambda i: (0, 0)),       # b2  (resident)
            ],
            out_specs=[
                pl.BlockSpec((tm, o_p), lambda i: (i, 0)),      # output
                pl.BlockSpec((tm, h_p), lambda i: (i, 0)),      # new_hidden
            ],
        ),
        compiler_params=pltpu.CompilerParams(
            dimension_semantics=("parallel",),      # M tiles shard across v7x TCs
            vmem_limit_bytes=32 * 1024 * 1024,
        ),
        cost_estimate=pl.CostEstimate(
            flops=flops,
            transcendentals=transcendentals,
            bytes_accessed=bytes_accessed,
        ),
    )(x_p, hs_p, w1x_p, w1h_p, b1_p, w2_p, b2_p)

    output = out_p[:batch, :out_size]
    new_hidden = newh_p[:batch, :hidden]
    return output, new_hidden


def init_exrnn_params(key, layers_dim):
    input_size, hidden_size, output_size = layers_dim[0], layers_dim[1], layers_dim[-1]
    k1, k2, k3, k4 = jax.random.split(key, 4)
    # nn.Linear default init: U(-1/sqrt(fan_in), 1/sqrt(fan_in)) for W and b.
    fan1 = input_size + hidden_size
    lim1 = 1.0 / math.sqrt(fan1)
    w1 = jax.random.uniform(k1, (fan1, hidden_size), jnp.float32, -lim1, lim1)
    b1 = jax.random.uniform(k2, (hidden_size,), jnp.float32, -lim1, lim1)
    lim2 = 1.0 / math.sqrt(hidden_size)
    w2 = jax.random.uniform(k3, (hidden_size, output_size), jnp.float32, -lim2, lim2)
    b2 = jax.random.uniform(k4, (output_size,), jnp.float32, -lim2, lim2)
    return {"w1": w1, "b1": b1, "w2": w2, "b2": b2}


def init_hidden(bs, hidden_size):
    return jnp.zeros((bs, hidden_size), jnp.float32)


if __name__ == "__main__":
    key = jax.random.PRNGKey(0)
    k_p, k_x, k_h = jax.random.split(key, 3)

    # Small shapes consistent with ExRNN (sentiment): layers_dim = [100, 64, 1]
    batch, input_size, hidden_size, output_size = 6, 100, 64, 1
    layers_dim = [input_size, hidden_size, output_size]

    params = init_exrnn_params(k_p, layers_dim)
    x = jax.random.normal(k_x, (batch, input_size), dtype=jnp.float32)
    # init_hidden gives zeros; perturb so the recurrent path is exercised too.
    h0 = init_hidden(batch, hidden_size) + jax.random.normal(
        k_h, (batch, hidden_size), dtype=jnp.float32)

    output, new_hidden = exrnn_forward(params, x, h0)
    output, new_hidden = jax.block_until_ready((output, new_hidden))

    # Reference (plain JAX, mirrors the PyTorch forward).
    a = jnp.concatenate([x, h0], axis=1)
    new_hidden_ref = jax.nn.sigmoid(a @ params["w1"] + params["b1"])
    output_ref = jax.nn.sigmoid(new_hidden_ref @ params["w2"] + params["b2"])

    assert output.shape == (batch, output_size)
    assert new_hidden.shape == (batch, hidden_size)
    assert jnp.allclose(new_hidden, new_hidden_ref, atol=1e-5, rtol=1e-5)
    assert jnp.allclose(output, output_ref, atol=1e-5, rtol=1e-5)

    print("KERNEL_OK")
</pallas_src>

<mosaic_0001>
module attributes {stable_mosaic.version = 11 : i64} {
  func.func @_exrnn_step_kernel(%arg0: i32, %arg1: memref<8x128xf32, #tpu.memory_space<vmem>>, %arg2: memref<8x128xf32, #tpu.memory_space<vmem>>, %arg3: memref<128x128xf32, #tpu.memory_space<vmem>>, %arg4: memref<128x128xf32, #tpu.memory_space<vmem>>, %arg5: memref<1x128xf32, #tpu.memory_space<vmem>>, %arg6: memref<128x128xf32, #tpu.memory_space<vmem>>, %arg7: memref<1x128xf32, #tpu.memory_space<vmem>>, %arg8: memref<8x128xf32, #tpu.memory_space<vmem>>, %arg9: memref<8x128xf32, #tpu.memory_space<vmem>>) attributes {dimension_semantics = [#tpu.dimension_semantics<parallel>], iteration_bounds = array<i64: 1>, scalar_prefetch = 0 : i64, scratch_operands = 0 : i64, tpu.core_type = #tpu.core_type<tc>, window_params = [{transform_indices = @transform_0, window_bounds = array<i64: 8, 128>}, {transform_indices = @transform_1, window_bounds = array<i64: 8, 128>}, {pipeline_mode = #tpu.pipeline_mode<synchronous>, transform_indices = @transform_2, window_bounds = array<i64: 128, 128>}, {pipeline_mode = #tpu.pipeline_mode<synchronous>, transform_indices = @transform_3, window_bounds = array<i64: 128, 128>}, {pipeline_mode = #tpu.pipeline_mode<synchronous>, transform_indices = @transform_4, window_bounds = array<i64: 1, 128>}, {pipeline_mode = #tpu.pipeline_mode<synchronous>, transform_indices = @transform_5, window_bounds = array<i64: 128, 128>}, {pipeline_mode = #tpu.pipeline_mode<synchronous>, transform_indices = @transform_6, window_bounds = array<i64: 1, 128>}, {transform_indices = @transform_7, window_bounds = array<i64: 8, 128>}, {transform_indices = @transform_8, window_bounds = array<i64: 8, 128>}]} {
    %c0 = arith.constant 0 : index
    %c0_0 = arith.constant 0 : index
    %0 = vector.load %arg1[%c0, %c0_0] : memref<8x128xf32, #tpu.memory_space<vmem>>, vector<8x128xf32>
    %c0_1 = arith.constant 0 : index
    %c0_2 = arith.constant 0 : index
    %1 = vector.load %arg3[%c0_1, %c0_2] : memref<128x128xf32, #tpu.memory_space<vmem>>, vector<128x128xf32>
    %cst = arith.constant dense<0.000000e+00> : vector<8x128xf32>
    %2 = tpu.matmul %0, %1, %cst {dimension_numbers = #tpu.dot_dimension_numbers<[1], [0], [0], [1], [0, 0, 1, 1], [], []>} : vector<8x128xf32>, vector<128x128xf32>, vector<8x128xf32> -> vector<8x128xf32>
    %c0_3 = arith.constant 0 : index
    %c0_4 = arith.constant 0 : index
    %3 = vector.load %arg2[%c0_3, %c0_4] : memref<8x128xf32, #tpu.memory_space<vmem>>, vector<8x128xf32>
    %c0_5 = arith.constant 0 : index
    %c0_6 = arith.constant 0 : index
    %4 = vector.load %arg4[%c0_5, %c0_6] : memref<128x128xf32, #tpu.memory_space<vmem>>, vector<128x128xf32>
    %cst_7 = arith.constant dense<0.000000e+00> : vector<8x128xf32>
    %5 = tpu.matmul %3, %4, %cst_7 {dimension_numbers = #tpu.dot_dimension_numbers<[1], [0], [0], [1], [0, 0, 1, 1], [], []>} : vector<8x128xf32>, vector<128x128xf32>, vector<8x128xf32> -> vector<8x128xf32>
    %6 = arith.addf %2, %5 : vector<8x128xf32>
    %c0_8 = arith.constant 0 : index
    %c0_9 = arith.constant 0 : index
    %7 = vector.load %arg5[%c0_8, %c0_9] : memref<1x128xf32, #tpu.memory_space<vmem>>, vector<1x128xf32>
    %8 = vector.broadcast %7 : vector<1x128xf32> to vector<8x128xf32>
    %9 = arith.addf %6, %8 : vector<8x128xf32>
    %cst_10 = arith.constant 0.000000e+00 : f32
    %10 = vector.broadcast %cst_10 : f32 to vector<8x128xf32>
    %11 = arith.subf %10, %9 : vector<8x128xf32>
    %12 = math.exp %11 : vector<8x128xf32>
    %cst_11 = arith.constant 1.000000e+00 : f32
    %13 = vector.broadcast %cst_11 : f32 to vector<8x128xf32>
    %14 = arith.addf %13, %12 : vector<8x128xf32>
    %cst_12 = arith.constant 1.000000e+00 : f32
    %15 = vector.broadcast %cst_12 : f32 to vector<8x128xf32>
    %16 = arith.divf %15, %14 : vector<8x128xf32>
    %c0_13 = arith.constant 0 : index
    %c0_14 = arith.constant 0 : index
    %17 = vector.load %arg9[%c0_13, %c0_14] : memref<8x128xf32, #tpu.memory_space<vmem>>, vector<8x128xf32>
    tpu.vector_store %arg9[%c0_13, %c0_14], %16 {strides = array<i32>} : memref<8x128xf32, #tpu.memory_space<vmem>>, vector<8x128xf32>,
    %c0_15 = arith.constant 0 : index
    %c0_16 = arith.constant 0 : index
    %18 = vector.load %arg6[%c0_15, %c0_16] : memref<128x128xf32, #tpu.memory_space<vmem>>, vector<128x128xf32>
    %cst_17 = arith.constant dense<0.000000e+00> : vector<8x128xf32>
    %19 = tpu.matmul %16, %18, %cst_17 {dimension_numbers = #tpu.dot_dimension_numbers<[1], [0], [0], [1], [0, 0, 1, 1], [], []>} : vector<8x128xf32>, vector<128x128xf32>, vector<8x128xf32> -> vector<8x128xf32>
    %c0_18 = arith.constant 0 : index
    %c0_19 = arith.constant 0 : index
    %20 = vector.load %arg7[%c0_18, %c0_19] : memref<1x128xf32, #tpu.memory_space<vmem>>, vector<1x128xf32>
    %21 = vector.broadcast %20 : vector<1x128xf32> to vector<8x128xf32>
    %22 = arith.addf %19, %21 : vector<8x128xf32>
    %cst_20 = arith.constant 0.000000e+00 : f32
    %23 = vector.broadcast %cst_20 : f32 to vector<8x128xf32>
    %24 = arith.subf %23, %22 : vector<8x128xf32>
    %25 = math.exp %24 : vector<8x128xf32>
    %cst_21 = arith.constant 1.000000e+00 : f32
    %26 = vector.broadcast %cst_21 : f32 to vector<8x128xf32>
    %27 = arith.addf %26, %25 : vector<8x128xf32>
    %cst_22 = arith.constant 1.000000e+00 : f32
    %28 = vector.broadcast %cst_22 : f32 to vector<8x128xf32>
    %29 = arith.divf %28, %27 : vector<8x128xf32>
    %c0_23 = arith.constant 0 : index
    %c0_24 = arith.constant 0 : index
    %30 = vector.load %arg8[%c0_23, %c0_24] : memref<8x128xf32, #tpu.memory_space<vmem>>, vector<8x128xf32>
    tpu.vector_store %arg8[%c0_23, %c0_24], %29 {strides = array<i32>} : memref<8x128xf32, #tpu.memory_space<vmem>>, vector<8x128xf32>,
    return
  }
  func.func @transform_0(%arg0: i32) -> (i32, i32) {
    %c0_i32 = arith.constant 0 : i32
    %c0_i32_0 = arith.constant 0 : i32
    return %arg0, %c0_i32 : i32, i32
  }
  func.func @transform_1(%arg0: i32) -> (i32, i32) {
    %c0_i32 = arith.constant 0 : i32
    %c0_i32_0 = arith.constant 0 : i32
    return %arg0, %c0_i32 : i32, i32
  }
  func.func @transform_2(%arg0: i32) -> (i32, i32) {
    %c0_i32 = arith.constant 0 : i32
    %c0_i32_0 = arith.constant 0 : i32
    %c0_i32_1 = arith.constant 0 : i32
    return %c0_i32, %c0_i32_0 : i32, i32
  }
  func.func @transform_3(%arg0: i32) -> (i32, i32) {
    %c0_i32 = arith.constant 0 : i32
    %c0_i32_0 = arith.constant 0 : i32
    %c0_i32_1 = arith.constant 0 : i32
    return %c0_i32, %c0_i32_0 : i32, i32
  }
  func.func @transform_4(%arg0: i32) -> (i32, i32) {
    %c0_i32 = arith.constant 0 : i32
    %c0_i32_0 = arith.constant 0 : i32
    %c0_i32_1 = arith.constant 0 : i32
    return %c0_i32, %c0_i32_0 : i32, i32
  }
  func.func @transform_5(%arg0: i32) -> (i32, i32) {
    %c0_i32 = arith.constant 0 : i32
    %c0_i32_0 = arith.constant 0 : i32
    %c0_i32_1 = arith.constant 0 : i32
    return %c0_i32, %c0_i32_0 : i32, i32
  }
  func.func @transform_6(%arg0: i32) -> (i32, i32) {
    %c0_i32 = arith.constant 0 : i32
    %c0_i32_0 = arith.constant 0 : i32
    %c0_i32_1 = arith.constant 0 : i32
    return %c0_i32, %c0_i32_0 : i32, i32
  }
  func.func @transform_7(%arg0: i32) -> (i32, i32) {
    %c0_i32 = arith.constant 0 : i32
    %c0_i32_0 = arith.constant 0 : i32
    return %arg0, %c0_i32 : i32, i32
  }
  func.func @transform_8(%arg0: i32) -> (i32, i32) {
    %c0_i32 = arith.constant 0 : i32
    %c0_i32_0 = arith.constant 0 : i32
    return %arg0, %c0_i32 : i32, i32
  }
}

</mosaic_0001>

<llo_original>
// kernel: tpu_custom_call.1
$region0: #{tpu_custom_call.1}
  #allocation0 [shape = 'u32[]', space=smem, size = 0x4, offset = 0x4, fixed_abs, tag = 'smem constant byte address 0x4 - core index']
  #allocation1 [shape = 'u32[144,128]{1,0:T(1,128)}', space=vmem, size = 0x12000, scoped, tag = 'internal scratch']
  %s0 = inlined_call_operand.hbm [shape: f32[8,128], index: 0, kind: input, shape index: {}]
  %s1 = inlined_call_operand.hbm [shape: f32[8,128], index: 1, kind: input, shape index: {}]
  %s2 = inlined_call_operand.hbm [shape: f32[128,128], index: 2, kind: input, shape index: {}]
  %s3 = inlined_call_operand.hbm [shape: f32[128,128], index: 3, kind: input, shape index: {}]
  %s4 = inlined_call_operand.vmem [shape: f32[1,128], index: 4, kind: input, shape index: {}]
  %s5 = inlined_call_operand.hbm [shape: f32[128,128], index: 5, kind: input, shape index: {}]
  %s6 = inlined_call_operand.vmem [shape: f32[1,128], index: 6, kind: input, shape index: {}]
  %s7 = inlined_call_operand.hbm [shape: f32[8,128], index: 7, kind: output, shape index: {0}]
  %s8 = inlined_call_operand.hbm [shape: f32[8,128], index: 8, kind: output, shape index: {1}]
  %9 = xla_tuple %s7, %s8
  %s10 = sld [smem:[#allocation0]]
  $region66: #{tpu_custom_call.1} parent=0
    _
  %s12 = ssub.s32 1, %s10
  %s13 = scalar_select 0, %s12, %s10
  $region1: #{tpu_custom_call.1} parent=0
    #allocation2 [shape = 'u8[4096]{0}', space=vmem, size = 0x1000, scoped, tag = 'input window, operand 0, single buffered']
    #allocation3 [shape = 's32[1]{0}', space=sflag, size = 0x4, scoped, tag = 'scoped memory for tpu_custom_call.1']
    #allocation4 [shape = 's32[1]{0}', space=sflag, size = 0x4, scoped, tag = 'scoped memory for tpu_custom_call.1']
    #allocation5 [shape = 'u8[4096]{0}', space=vmem, size = 0x1000, scoped, tag = 'input window, operand 1, single buffered']
    #allocation6 [shape = 's32[1]{0}', space=sflag, size = 0x4, scoped, tag = 'scoped memory for tpu_custom_call.1']
    #allocation7 [shape = 'u8[65536]{0}', space=vmem, size = 0x10000, scoped, tag = 'input window, operand 2, single buffered']
    #allocation8 [shape = 'u8[65536]{0}', space=vmem, size = 0x10000, scoped, tag = 'input window, operand 3, single buffered']
    #allocation9 [shape = 's32[1]{0}', space=sflag, size = 0x4, scoped, tag = 'scoped memory for tpu_custom_call.1']
    #allocation10 [shape = 'u8[65536]{0}', space=vmem, size = 0x10000, scoped, tag = 'input window, operand 5, single buffered']
    #allocation11 [shape = 'u8[4096]{0}', space=vmem, size = 0x1000, scoped, tag = 'output window, operand 0, single buffered']
    #allocation12 [shape = 'u8[4096]{0}', space=vmem, size = 0x1000, scoped, tag = 'output window, operand 1, single buffered']
    #allocation13 [shape = 's32[1]{0}', space=sflag, size = 0x4, scoped, tag = 'scoped memory for tpu_custom_call.1']
    %14 = vsyncpa [#allocation3], 0
    %15 = vsyncpa [#allocation6], 0
    %16 = vsyncpa [#allocation9], 0
    %17 = vsyncpa [#allocation4], 0
    %18 = vsyncpa [#allocation13], 0
    // Predicated region
    $region2: #{tpu_custom_call.1} parent=1 // pred_check
      _
    $region3: #{tpu_custom_call.1} parent=1 // pred_check_branch
      %20 = sbr.rel (0) target = $region5
    $region4: #{tpu_custom_call.1} parent=1 // pred_region
      %s22 = ssub.s32 128, 128
      %23 = vsyncadd [#allocation3], %s22
      %s25 = sshll.u32 [#allocation2], 4
      %s26 = int_to_ptr.vmem [resolvable:$true] %s25
      %28 = dma.hbm_to_vmem [thread:$0]  %s0, 128, %s26, [#allocation3]
    $region5: #{tpu_custom_call.1} parent=1 // pred_fallthru
      _
    // Predicated region
    $region6: #{tpu_custom_call.1} parent=1 // pred_check
      _
    $region7: #{tpu_custom_call.1} parent=1 // pred_check_branch
      %30 = sbr.rel (0) target = $region9
    $region8: #{tpu_custom_call.1} parent=1 // pred_region
      %s32 = ssub.s32 128, 128
      %33 = vsyncadd [#allocation6], %s32
      %s35 = sshll.u32 [#allocation5], 4
      %s36 = int_to_ptr.vmem [resolvable:$true] %s35
      %38 = dma.hbm_to_vmem [thread:$0]  %s1, 128, %s36, [#allocation6]
    $region9: #{tpu_custom_call.1} parent=1 // pred_fallthru
      _
    // Predicated region
    $region10: #{tpu_custom_call.1} parent=1 // pred_check
      _
    $region11: #{tpu_custom_call.1} parent=1 // pred_check_branch
      %40 = sbr.rel (0) target = $region13
    $region12: #{tpu_custom_call.1} parent=1 // pred_region
      %s42 = ssub.s32 2048, 2048
      %43 = vsyncadd [#allocation6], %s42
      %s44 = sshll.u32 [#allocation7], 4
      %s45 = int_to_ptr.vmem [resolvable:$true] %s44
      %50 = dma.hbm_to_vmem [thread:$0]  %s2, 2048, %s45, [#allocation6], 128, 128, 8
    $region13: #{tpu_custom_call.1} parent=1 // pred_fallthru
      _
    // Predicated region
    $region14: #{tpu_custom_call.1} parent=1 // pred_check
      _
    $region15: #{tpu_custom_call.1} parent=1 // pred_check_branch
      %52 = sbr.rel (0) target = $region17
    $region16: #{tpu_custom_call.1} parent=1 // pred_region
      %s54 = ssub.s32 2048, 2048
      %55 = vsyncadd [#allocation9], %s54
      %s56 = sshll.u32 [#allocation8], 4
      %s57 = int_to_ptr.vmem [resolvable:$true] %s56
      %62 = dma.hbm_to_vmem [thread:$0]  %s3, 2048, %s57, [#allocation9], 128, 128, 8
    $region17: #{tpu_custom_call.1} parent=1 // pred_fallthru
      _
    // Predicated region
    $region18: #{tpu_custom_call.1} parent=1 // pred_check
      _
    $region19: #{tpu_custom_call.1} parent=1 // pred_check_branch
      %64 = sbr.rel (0) target = $region21
    $region20: #{tpu_custom_call.1} parent=1 // pred_region
      _
    $region21: #{tpu_custom_call.1} parent=1 // pred_fallthru
      _
    // Predicated region
    $region22: #{tpu_custom_call.1} parent=1 // pred_check
      _
    $region23: #{tpu_custom_call.1} parent=1 // pred_check_branch
      %66 = sbr.rel (0) target = $region25
    $region24: #{tpu_custom_call.1} parent=1 // pred_region
      %s68 = ssub.s32 2048, 2048
      %69 = vsyncadd [#allocation9], %s68
      %s70 = sshll.u32 [#allocation10], 4
      %s71 = int_to_ptr.vmem [resolvable:$true] %s70
      %76 = dma.hbm_to_vmem [thread:$0]  %s5, 2048, %s71, [#allocation9], 128, 128, 8
    $region25: #{tpu_custom_call.1} parent=1 // pred_fallthru
      _
    // Predicated region
    $region26: #{tpu_custom_call.1} parent=1 // pred_check
      _
    $region27: #{tpu_custom_call.1} parent=1 // pred_check_branch
      %78 = sbr.rel (0) target = $region29
    $region28: #{tpu_custom_call.1} parent=1 // pred_region
      _
    $region29: #{tpu_custom_call.1} parent=1 // pred_fallthru
      _
    // Predicated region
    $region30: #{tpu_custom_call.1} parent=1 // pred_check
      _
    $region31: #{tpu_custom_call.1} parent=1 // pred_check_branch
      %80 = sbr.rel (0) target = $region33
    $region32: #{tpu_custom_call.1} parent=1 // pred_region
      %81 = dma.done [#allocation3], 128
    $region33: #{tpu_custom_call.1} parent=1 // pred_fallthru
      _
    // Predicated region
    $region34: #{tpu_custom_call.1} parent=1 // pred_check
      _
    $region35: #{tpu_custom_call.1} parent=1 // pred_check_branch
      %83 = sbr.rel (0) target = $region37
    $region36: #{tpu_custom_call.1} parent=1 // pred_region
      %84 = dma.done [#allocation6], 128
    $region37: #{tpu_custom_call.1} parent=1 // pred_fallthru
      _
    // Predicated region
    $region38: #{tpu_custom_call.1} parent=1 // pred_check
      _
    $region39: #{tpu_custom_call.1} parent=1 // pred_check_branch
      %86 = sbr.rel (0) target = $region41
    $region40: #{tpu_custom_call.1} parent=1 // pred_region
      %87 = dma.done [#allocation6], 2048
    $region41: #{tpu_custom_call.1} parent=1 // pred_fallthru
      _
    // Predicated region
    $region42: #{tpu_custom_call.1} parent=1 // pred_check
      _
    $region43: #{tpu_custom_call.1} parent=1 // pred_check_branch
      %89 = sbr.rel (0) target = $region45
    $region44: #{tpu_custom_call.1} parent=1 // pred_region
      %90 = dma.done [#allocation9], 2048
    $region45: #{tpu_custom_call.1} parent=1 // pred_fallthru
      _
    // Predicated region
    $region46: #{tpu_custom_call.1} parent=1 // pred_check
      _
    $region47: #{tpu_custom_call.1} parent=1 // pred_check_branch
      %92 = sbr.rel (0) target = $region49
    $region48: #{tpu_custom_call.1} parent=1 // pred_region
      %93 = dma.done [#allocation9], 2048
    $region49: #{tpu_custom_call.1} parent=1 // pred_fallthru
      _
    %v94 = vld [vmem:[#allocation2] sm:$0xff]
    %v95 = vld [vmem:[#allocation7] sm:$0xff]
    %v96 = vld [vmem:[#allocation7 + $0x8] sm:$0xff]
    %v97 = vld [vmem:[#allocation7 + $0x10] sm:$0xff]
    %v98 = vld [vmem:[#allocation7 + $0x18] sm:$0xff]
    %v99 = vld [vmem:[#allocation7 + $0x20] sm:$0xff]
    %v100 = vld [vmem:[#allocation7 + $0x28] sm:$0xff]
    %v101 = vld [vmem:[#allocation7 + $0x30] sm:$0xff]
    %v102 = vld [vmem:[#allocation7 + $0x38] sm:$0xff]
    %v103 = vld [vmem:[#allocation7 + $0x40] sm:$0xff]
    %v104 = vld [vmem:[#allocation7 + $0x48] sm:$0xff]
    %v105 = vld [vmem:[#allocation7 + $0x50] sm:$0xff]
    %v106 = vld [vmem:[#allocation7 + $0x58] sm:$0xff]
    %v107 = vld [vmem:[#allocation7 + $0x60] sm:$0xff]
    %v108 = vld [vmem:[#allocation7 + $0x68] sm:$0xff]
    %v109 = vld [vmem:[#allocation7 + $0x70] sm:$0xff]
    %v110 = vld [vmem:[#allocation7 + $0x78] sm:$0xff]
    %v111 = vld [vmem:[#allocation5] sm:$0xff]
    %v112 = vld [vmem:[#allocation8] sm:$0xff]
    %v113 = vld [vmem:[#allocation8 + $0x8] sm:$0xff]
    %v114 = vld [vmem:[#allocation8 + $0x10] sm:$0xff]
    %v115 = vld [vmem:[#allocation8 + $0x18] sm:$0xff]
    %v116 = vld [vmem:[#allocation8 + $0x20] sm:$0xff]
    %v117 = vld [vmem:[#allocation8 + $0x28] sm:$0xff]
    %v118 = vld [vmem:[#allocation8 + $0x30] sm:$0xff]
    %v119 = vld [vmem:[#allocation8 + $0x38] sm:$0xff]
    %v120 = vld [vmem:[#allocation8 + $0x40] sm:$0xff]
    %v121 = vld [vmem:[#allocation8 + $0x48] sm:$0xff]
    %v122 = vld [vmem:[#allocation8 + $0x50] sm:$0xff]
    %v123 = vld [vmem:[#allocation8 + $0x58] sm:$0xff]
    %v124 = vld [vmem:[#allocation8 + $0x60] sm:$0xff]
    %v125 = vld [vmem:[#allocation8 + $0x68] sm:$0xff]
    %v126 = vld [vmem:[#allocation8 + $0x70] sm:$0xff]
    %v127 = vld [vmem:[#allocation8 + $0x78] sm:$0xff]
    %128 = vmatprep.subr.mxu0 0.0
    %129 = vmatpush1.msra.mxu0 %v112
    %130 = vmatprep.subr.mxu0 0.0
    %131 = vmatpush1.msra.mxu0 %v113
    %132 = vmatprep.subr.mxu0 0.0
    %133 = vmatpush1.msra.mxu0 %v114
    %134 = vmatprep.subr.mxu0 0.0
    %135 = vmatpush1.msra.mxu0 %v115
    %136 = vmatprep.subr.mxu0 0.0
    %137 = vmatpush1.msra.mxu0 %v116
    %138 = vmatprep.subr.mxu0 0.0
    %139 = vmatpush1.msra.mxu0 %v117
    %140 = vmatprep.subr.mxu0 0.0
    %141 = vmatpush1.msra.mxu0 %v118
    %142 = vmatprep.subr.mxu0 0.0
    %143 = vmatpush1.msra.mxu0 %v119
    %144 = vmatprep.subr.mxu0 0.0
    %145 = vmatpush1.msra.mxu0 %v120
    %146 = vmatprep.subr.mxu0 0.0
    %147 = vmatpush1.msra.mxu0 %v121
    %148 = vmatprep.subr.mxu0 0.0
    %149 = vmatpush1.msra.mxu0 %v122
    %150 = vmatprep.subr.mxu0 0.0
    %151 = vmatpush1.msra.mxu0 %v123
    %152 = vmatprep.subr.mxu0 0.0
    %153 = vmatpush1.msra.mxu0 %v124
    %154 = vmatprep.subr.mxu0 0.0
    %155 = vmatpush1.msra.mxu0 %v125
    %156 = vmatprep.subr.mxu0 0.0
    %157 = vmatpush1.msra.mxu0 %v126
    %158 = vmatprep.subr.mxu0 0.0
    %159 = vmatpush1.msra.mxu0 %v127
    %160 = vmatprep.subr.mxu0 0.0
    %161 = vmatpush1.msra.mxu0 0.0
    %162 = vmatprep.subr.mxu0 0.0
    %163 = vmatpush1.msra.mxu0 0.0
    %164 = vmatprep.subr.mxu0 0.0
    %165 = vmatpush1.msra.mxu0 0.0
    %166 = vmatprep.subr.mxu0 0.0
    %167 = vmatpush1.msra.mxu0 0.0
    %168 = vmatprep.subr.mxu0 0.0
    %169 = vmatpush1.msra.mxu0 0.0
    %170 = vmatprep.subr.mxu0 0.0
    %171 = vmatpush1.msra.mxu0 0.0
    %172 = vmatprep.subr.mxu0 0.0
    %173 = vmatpush1.msra.mxu0 0.0
    %174 = vmatprep.subr.mxu0 0.0
    %175 = vmatpush1.msra.mxu0 0.0
    %176 = vmatprep.subr.mxu0 0.0
    %177 = vmatpush1.msra.mxu0 0.0
    %178 = vmatprep.subr.mxu0 0.0
    %179 = vmatpush1.msra.mxu0 0.0
    %180 = vmatprep.subr.mxu0 0.0
    %181 = vmatpush1.msra.mxu0 0.0
    %182 = vmatprep.subr.mxu0 0.0
    %183 = vmatpush1.msra.mxu0 0.0
    %184 = vmatprep.subr.mxu0 0.0
    %185 = vmatpush1.msra.mxu0 0.0
    %186 = vmatprep.subr.mxu0 0.0
    %187 = vmatpush1.msra.mxu0 0.0
    %188 = vmatprep.subr.mxu0 0.0
    %189 = vmatpush1.msra.mxu0 0.0
    %190 = vmatprep.subr.mxu0 0.0
    %191 = vmatpush1.msra.mxu0 0.0
    %192 = vmatprep.mubr.f32.mxu0 0.0
    %193 = vmatmul.mubr.f32.gmra.mrb[0].mxu0 %v111
    %v194 = vpop.f32.mrb[0].mxu0
    %v195 = vadd.f32 0.0, %v194
    %v196 = vpop.f32.mrb[0].mxu0
    %197 = vdwg.mxu0
    %198 = vmatprep.subr.mxu0 0.0
    %199 = vmatpush1.msra.mxu0 %v95
    %200 = vmatprep.subr.mxu0 0.0
    %201 = vmatpush1.msra.mxu0 %v96
    %202 = vmatprep.subr.mxu0 0.0
    %203 = vmatpush1.msra.mxu0 %v97
    %204 = vmatprep.subr.mxu0 0.0
    %205 = vmatpush1.msra.mxu0 %v98
    %206 = vmatprep.subr.mxu0 0.0
    %207 = vmatpush1.msra.mxu0 %v99
    %208 = vmatprep.subr.mxu0 0.0
    %209 = vmatpush1.msra.mxu0 %v100
    %210 = vmatprep.subr.mxu0 0.0
    %211 = vmatpush1.msra.mxu0 %v101
    %212 = vmatprep.subr.mxu0 0.0
    %213 = vmatpush1.msra.mxu0 %v102
    %214 = vmatprep.subr.mxu0 0.0
    %215 = vmatpush1.msra.mxu0 %v103
    %216 = vmatprep.subr.mxu0 0.0
    %217 = vmatpush1.msra.mxu0 %v104
    %218 = vmatprep.subr.mxu0 0.0
    %219 = vmatpush1.msra.mxu0 %v105
    %220 = vmatprep.subr.mxu0 0.0
    %221 = vmatpush1.msra.mxu0 %v106
    %222 = vmatprep.subr.mxu0 0.0
    %223 = vmatpush1.msra.mxu0 %v107
    %224 = vmatprep.subr.mxu0 0.0
    %225 = vmatpush1.msra.mxu0 %v108
    %226 = vmatprep.subr.mxu0 0.0
    %227 = vmatpush1.msra.mxu0 %v109
    %228 = vmatprep.subr.mxu0 0.0
    %229 = vmatpush1.msra.mxu0 %v110
    %230 = vmatprep.subr.mxu0 0.0
    %231 = vmatpush1.msra.mxu0 0.0
    %232 = vmatprep.subr.mxu0 0.0
    %233 = vmatpush1.msra.mxu0 0.0
    %234 = vmatprep.subr.mxu0 0.0
    %235 = vmatpush1.msra.mxu0 0.0
    %236 = vmatprep.subr.mxu0 0.0
    %237 = vmatpush1.msra.mxu0 0.0
    %238 = vmatprep.subr.mxu0 0.0
    %239 = vmatpush1.msra.mxu0 0.0
    %240 = vmatprep.subr.mxu0 0.0
    %241 = vmatpush1.msra.mxu0 0.0
    %242 = vmatprep.subr.mxu0 0.0
    %243 = vmatpush1.msra.mxu0 0.0
    %244 = vmatprep.subr.mxu0 0.0
    %245 = vmatpush1.msra.mxu0 0.0
    %246 = vmatprep.subr.mxu0 0.0
    %247 = vmatpush1.msra.mxu0 0.0
    %248 = vmatprep.subr.mxu0 0.0
    %249 = vmatpush1.msra.mxu0 0.0
    %250 = vmatprep.subr.mxu0 0.0
    %251 = vmatpush1.msra.mxu0 0.0
    %252 = vmatprep.subr.mxu0 0.0
    %253 = vmatpush1.msra.mxu0 0.0
    %254 = vmatprep.subr.mxu0 0.0
    %255 = vmatpush1.msra.mxu0 0.0
    %256 = vmatprep.subr.mxu0 0.0
    %257 = vmatpush1.msra.mxu0 0.0
    %258 = vmatprep.subr.mxu0 0.0
    %259 = vmatpush1.msra.mxu0 0.0
    %260 = vmatprep.subr.mxu0 0.0
    %261 = vmatpush1.msra.mxu0 0.0
    %262 = vmatprep.mubr.f32.mxu0 0.0
    %263 = vmatmul.mubr.f32.gmra.mrb[0].mxu0 %v94
    %v264 = vpop.f32.mrb[0].mxu0
    %v265 = vadd.f32 %v195, %v264
    %v266 = vpop.f32.mrb[0].mxu0
    %267 = vdwg.mxu0
    %v268 = vld [vmem:[%s4] sm:$0x1]
    %v270 = vlaneseq
    %v271 = vshrl.u32 %v270, 7
    %v272 = vsub.s32 0, %v271
    %v273 = vrot.slane %v268, %v272
    %v275 = vadd.f32 %v265, %v273
    %v276 = vsub.f32 0.0, %v275
    %v277 = vmul.f32 %v276, 1.442695
    %v278 = vpow.pop %v277
    %v279 = vadd.f32 %v278, 1.0
    %v280 = vrcp.pop %v279
    %v281 = vmul.f32 1.0, %v280
    %282 = vst [vmem:[#allocation12] sm:$0xff] %v281
    %v283 = vld [vmem:[#allocation10] sm:$0xff]
    %v284 = vld [vmem:[#allocation10 + $0x8] sm:$0xff]
    %v285 = vld [vmem:[#allocation10 + $0x10] sm:$0xff]
    %v286 = vld [vmem:[#allocation10 + $0x18] sm:$0xff]
    %v287 = vld [vmem:[#allocation10 + $0x20] sm:$0xff]
    %v288 = vld [vmem:[#allocation10 + $0x28] sm:$0xff]
    %v289 = vld [vmem:[#allocation10 + $0x30] sm:$0xff]
    %v290 = vld [vmem:[#allocation10 + $0x38] sm:$0xff]
    %v291 = vld [vmem:[#allocation10 + $0x40] sm:$0xff]
    %v292 = vld [vmem:[#allocation10 + $0x48] sm:$0xff]
    %v293 = vld [vmem:[#allocation10 + $0x50] sm:$0xff]
    %v294 = vld [vmem:[#allocation10 + $0x58] sm:$0xff]
    %v295 = vld [vmem:[#allocation10 + $0x60] sm:$0xff]
    %v296 = vld [vmem:[#allocation10 + $0x68] sm:$0xff]
    %v297 = vld [vmem:[#allocation10 + $0x70] sm:$0xff]
    %v298 = vld [vmem:[#allocation10 + $0x78] sm:$0xff]
    %v299 = vld [vmem:[%s6] sm:$0x1]
    %v301 = vlaneseq
    %v302 = vshrl.u32 %v301, 7
    %v303 = vsub.s32 0, %v302
    %v304 = vrot.slane %v299, %v303
    %306 = vmatprep.subr.mxu0 0.0
    %307 = vmatpush1.msra.mxu0 %v283
    %308 = vmatprep.subr.mxu0 0.0
    %309 = vmatpush1.msra.mxu0 %v284
    %310 = vmatprep.subr.mxu0 0.0
    %311 = vmatpush1.msra.mxu0 %v285
    %312 = vmatprep.subr.mxu0 0.0
    %313 = vmatpush1.msra.mxu0 %v286
    %314 = vmatprep.subr.mxu0 0.0
    %315 = vmatpush1.msra.mxu0 %v287
    %316 = vmatprep.subr.mxu0 0.0
    %317 = vmatpush1.msra.mxu0 %v288
    %318 = vmatprep.subr.mxu0 0.0
    %319 = vmatpush1.msra.mxu0 %v289
    %320 = vmatprep.subr.mxu0 0.0
    %321 = vmatpush1.msra.mxu0 %v290
    %322 = vmatprep.subr.mxu0 0.0
    %323 = vmatpush1.msra.mxu0 %v291
    %324 = vmatprep.subr.mxu0 0.0
    %325 = vmatpush1.msra.mxu0 %v292
    %326 = vmatprep.subr.mxu0 0.0
    %327 = vmatpush1.msra.mxu0 %v293
    %328 = vmatprep.subr.mxu0 0.0
    %329 = vmatpush1.msra.mxu0 %v294
    %330 = vmatprep.subr.mxu0 0.0
    %331 = vmatpush1.msra.mxu0 %v295
    %332 = vmatprep.subr.mxu0 0.0
    %333 = vmatpush1.msra.mxu0 %v296
    %334 = vmatprep.subr.mxu0 0.0
    %335 = vmatpush1.msra.mxu0 %v297
    %336 = vmatprep.subr.mxu0 0.0
    %337 = vmatpush1.msra.mxu0 %v298
    %338 = vmatprep.subr.mxu0 0.0
    %339 = vmatpush1.msra.mxu0 0.0
    %340 = vmatprep.subr.mxu0 0.0
    %341 = vmatpush1.msra.mxu0 0.0
    %342 = vmatprep.subr.mxu0 0.0
    %343 = vmatpush1.msra.mxu0 0.0
    %344 = vmatprep.subr.mxu0 0.0
    %345 = vmatpush1.msra.mxu0 0.0
    %346 = vmatprep.subr.mxu0 0.0
    %347 = vmatpush1.msra.mxu0 0.0
    %348 = vmatprep.subr.mxu0 0.0
    %349 = vmatpush1.msra.mxu0 0.0
    %350 = vmatprep.subr.mxu0 0.0
    %351 = vmatpush1.msra.mxu0 0.0
    %352 = vmatprep.subr.mxu0 0.0
    %353 = vmatpush1.msra.mxu0 0.0
    %354 = vmatprep.subr.mxu0 0.0
    %355 = vmatpush1.msra.mxu0 0.0
    %356 = vmatprep.subr.mxu0 0.0
    %357 = vmatpush1.msra.mxu0 0.0
    %358 = vmatprep.subr.mxu0 0.0
    %359 = vmatpush1.msra.mxu0 0.0
    %360 = vmatprep.subr.mxu0 0.0
    %361 = vmatpush1.msra.mxu0 0.0
    %362 = vmatprep.subr.mxu0 0.0
    %363 = vmatpush1.msra.mxu0 0.0
    %364 = vmatprep.subr.mxu0 0.0
    %365 = vmatpush1.msra.mxu0 0.0
    %366 = vmatprep.subr.mxu0 0.0
    %367 = vmatpush1.msra.mxu0 0.0
    %368 = vmatprep.subr.mxu0 0.0
    %369 = vmatpush1.msra.mxu0 0.0
    %370 = vmatprep.mubr.f32.mxu0 0.0
    %371 = vmatmul.mubr.f32.gmra.mrb[0].mxu0 %v281
    %v372 = vpop.f32.mrb[0].mxu0
    %v373 = vadd.f32 %v304, %v372
    %v374 = vpop.f32.mrb[0].mxu0
    %375 = vdwg.mxu0
    %v376 = vsub.f32 0.0, %v373
    %v377 = vmul.f32 %v376, 1.442695
    %v378 = vpow.pop %v377
    %v379 = vadd.f32 %v378, 1.0
    %v380 = vrcp.pop %v379
    %v381 = vmul.f32 1.0, %v380
    %382 = vst [vmem:[#allocation11] sm:$0xff] %v381
    // Predicated region
    $region50: #{tpu_custom_call.1} parent=1 // pred_check
      _
    $region51: #{tpu_custom_call.1} parent=1 // pred_check_branch
      %384 = sbr.rel (0) target = $region53
    $region52: #{tpu_custom_call.1} parent=1 // pred_region
      %s386 = ssub.s32 128, 128
      %387 = vsyncadd [#allocation4], %s386
      %s389 = sshll.u32 [#allocation11], 4
      %s390 = int_to_ptr.vmem [resolvable:$true] %s389
      %392 = dma.vmem_to_hbm [thread:$0]  %s390, 128, %s7, [#allocation4]
    $region53: #{tpu_custom_call.1} parent=1 // pred_fallthru
      _
    // Predicated region
    $region54: #{tpu_custom_call.1} parent=1 // pred_check
      _
    $region55: #{tpu_custom_call.1} parent=1 // pred_check_branch
      %394 = sbr.rel (0) target = $region57
    $region56: #{tpu_custom_call.1} parent=1 // pred_region
      %s396 = ssub.s32 128, 128
      %397 = vsyncadd [#allocation13], %s396
      %s399 = sshll.u32 [#allocation12], 4
      %s400 = int_to_ptr.vmem [resolvable:$true] %s399
      %402 = dma.vmem_to_hbm [thread:$0]  %s400, 128, %s8, [#allocation13]
    $region57: #{tpu_custom_call.1} parent=1 // pred_fallthru
      _
    // Predicated region
    $region58: #{tpu_custom_call.1} parent=1 // pred_check
      _
    $region59: #{tpu_custom_call.1} parent=1 // pred_check_branch
      %404 = sbr.rel (0) target = $region61
    $region60: #{tpu_custom_call.1} parent=1 // pred_region
      %405 = dma.done [#allocation4], 128
    $region61: #{tpu_custom_call.1} parent=1 // pred_fallthru
      _
    // Predicated region
    $region62: #{tpu_custom_call.1} parent=1 // pred_check
      _
    $region63: #{tpu_custom_call.1} parent=1 // pred_check_branch
      %407 = sbr.rel (0) target = $region65
    $region64: #{tpu_custom_call.1} parent=1 // pred_region
      %408 = dma.done [#allocation13], 128
    $region65: #{tpu_custom_call.1} parent=1 // pred_fallthru
      _
    %409 = vsyncpa [#allocation3], 1
    %410 = vsyncpa [#allocation6], 1
    %411 = vsyncpa [#allocation9], 1
    %412 = vsyncpa [#allocation4], 1
    %413 = vsyncpa [#allocation13], 1

</llo_original>
